<compile_context>
chip_gen: v7x
topology: tpu7x:2x2x1
jax: 0.10.0
libtpu: 0.0.40
codegen_flags: <defaults>
</compile_context>

<pallas_src>
import functools

import jax
import jax.numpy as jnp
from jax import lax
from jax.experimental import pallas as pl
from jax.experimental.pallas import tpu as pltpu


def _conv_block_kernel(x_ref, halo_ref, w_ref, b_ref, o_ref, patch_ref,
                       *, K, TH, Wo, Cin):
    # x_ref:     (1, TH,   Wp, Cin)  padded-input rows i*TH .. i*TH+TH-1
    # halo_ref:  (1, K-1,  Wp, Cin)  rows (i+1)*TH .. (i+1)*TH+K-2 (halo below)
    # w_ref:     (Cout, K*K*Cin)     weights, im2col lane order (kh, kw, cin)
    # b_ref:     (Cout, 1)           float32 bias
    # o_ref:     (1, Cout, TH*Wo)    lane-dense output tile
    # patch_ref: (TH*Wo, K*K*Cin)    VMEM scratch in compute dtype (im2col)
    xm = x_ref[0]        # (TH,  Wp, Cin) — stays in compute dtype (no f32 upcast)
    xh = halo_ref[0]     # (K-1, Wp, Cin)

    # im2col: write each tap straight into the scratch patch (single
    # materialization; static Python unroll -> static slices only).
    for kh in range(K):
        n_main = (TH - kh) * Wo          # rows of this tap taken from xm
        for kw in range(K):
            c0 = (kh * K + kw) * Cin
            tap_m = xm[kh:, kw:kw + Wo, :].reshape(n_main, Cin)
            patch_ref[0:n_main, c0:c0 + Cin] = tap_m
            if kh > 0:                   # bottom kh rows come from the halo
                tap_h = xh[:kh, kw:kw + Wo, :].reshape(kh * Wo, Cin)
                patch_ref[n_main:TH * Wo, c0:c0 + Cin] = tap_h

    # One deep MXU contraction: (Cout, KKC) x (TH*Wo, KKC) -> (Cout, TH*Wo).
    # Contraction depth K*K*Cin; f32 accumulation regardless of compute dtype.
    # NOTE: default matmul precision (like the previous, validated version);
    # pin lax.Precision.HIGHEST if exact f32 parity with PyTorch is required.
    acc = lax.dot_general(
        w_ref[...], patch_ref[...],
        dimension_numbers=(((1,), (1,)), ((), ())),
        preferred_element_type=jnp.float32)
    o_ref[0] = (acc + b_ref[...]).astype(o_ref.dtype)   # bias add in f32


def _vmem_limits():
    """Generation-aware (v5e/v6e: 128 MiB, v7x: 64 MiB) VMEM limit + budget."""
    try:
        info = pltpu.get_tpu_info()
        cap = int(getattr(info, "vmem_capacity_bytes", 64 * 1024 * 1024))
    except Exception:  # pragma: no cover - conservative fallback
        cap = 64 * 1024 * 1024
    vmem_limit = min((cap * 3) // 4, 96 * 1024 * 1024)
    budget = (vmem_limit * 3) // 5       # headroom for Mosaic internals/spills
    return budget, vmem_limit


def _pick_row_tile(Ho, Wo, Wp, K, Cin, Cout, comp_bytes, out_bytes, budget):
    """Largest TH s.t. TH | Ho, (K-1) | TH, TH*Wo % 128 == 0, and an honest
    per-step working-set estimate (double-buffered blocks + scratch) fits."""
    best = None
    for th in range(1, Ho + 1):
        if Ho % th:
            continue
        if K > 1 and th % (K - 1):
            continue
        if (th * Wo) % 128 and th != Ho:
            continue
        in_blk = 2 * th * Wp * Cin * comp_bytes            # main rows, 2x buffered
        halo_blk = 2 * (K - 1) * Wp * Cin * comp_bytes      # halo rows, 2x buffered
        w_blk = 2 * Cout * K * K * Cin * comp_bytes         # weights (resident)
        patch = th * Wo * K * K * Cin * comp_bytes          # im2col scratch
        acc = Cout * th * Wo * 4                            # f32 matmul result
        out_blk = 2 * Cout * th * Wo * out_bytes            # output, 2x buffered
        if in_blk + halo_blk + w_blk + patch + acc + out_blk <= budget:
            best = th
    return best


def conv_block_forward(x_nchw, weight, bias, *, padding=1, stride=1,
                       row_tile=None, compute_dtype=None):
    """ConvBlock forward (default config): Conv2d(replicate pad) + bias.

    x_nchw : (B, Cin, H, W) float32 (PyTorch layout)
    weight : (Cout, Cin, K, K)
    bias   : (Cout,)
    compute_dtype : dtype fed to the MXU/im2col (e.g. jnp.bfloat16 on
        v6e/v7x; keep float32 on v5e). Accumulation, bias add and the
        returned output stay float32.
    returns: (B, Cout, Ho, Wo) in x_nchw.dtype (PyTorch layout)
    """
    assert stride == 1, "only stride=1 (module default) implemented"
    B, Cin, H, W = x_nchw.shape
    Cout, Cin_w, K, K2 = weight.shape
    assert Cin_w == Cin and K2 == K
    assert K >= 2, "TODO(synk): kernel_size=1 fast path"

    out_dtype = x_nchw.dtype
    compute_dtype = jnp.dtype(x_nchw.dtype if compute_dtype is None
                              else compute_dtype)
    comp_bytes = compute_dtype.itemsize
    out_bytes = jnp.dtype(out_dtype).itemsize

    Ho = H + 2 * padding - K + 1
    Wo = W + 2 * padding - K + 1
    Hp, Wp = H + 2 * padding, W + 2 * padding

    budget, vmem_limit = _vmem_limits()
    TH = (row_tile if row_tile is not None else
          _pick_row_tile(Ho, Wo, Wp, K, Cin, Cout, comp_bytes, out_bytes, budget))
    assert (TH is not None and Ho % TH == 0 and TH % (K - 1) == 0
            and ((TH * Wo) % 128 == 0 or TH == Ho)), \
        "unsupported shape; TODO(synk): ragged / masked row tiles"
    n_tiles = Ho // TH
    halo_step = TH // (K - 1)

    # ---- glue: one pass over the input (transpose + replicate pad + cast). ----
    x = jnp.transpose(x_nchw, (0, 2, 3, 1)).astype(compute_dtype)      # NHWC
    x = jnp.pad(x, ((0, 0), (padding, padding), (padding, padding), (0, 0)),
                mode="edge")                                           # (B,Hp,Wp,Cin)

    # weights -> (Cout, K*K*Cin) matching the im2col lane order (kh, kw, cin)
    w_mat = jnp.transpose(weight, (0, 2, 3, 1)).reshape(Cout, K * K * Cin)
    w_mat = w_mat.astype(compute_dtype)
    b2 = bias.astype(jnp.float32).reshape(Cout, 1)

    kernel = functools.partial(_conv_block_kernel, K=K, TH=TH, Wo=Wo, Cin=Cin)

    out_flat = pl.pallas_call(
        kernel,
        out_shape=jax.ShapeDtypeStruct((B, Cout, Ho * Wo), out_dtype),
        grid_spec=pltpu.PrefetchScalarGridSpec(
            num_scalar_prefetch=0,
            grid=(B, n_tiles),
            in_specs=[
                # main TH rows of the padded input for this row tile
                pl.BlockSpec((1, TH, Wp, Cin), lambda b, i: (b, i, 0, 0)),
                # (K-1)-row halo directly below (same array, overlapping window)
                pl.BlockSpec((1, K - 1, Wp, Cin),
                             lambda b, i: (b, (i + 1) * halo_step, 0, 0)),
                # weights / bias: constant block index -> fetched once, resident
                pl.BlockSpec((Cout, K * K * Cin), lambda b, i: (0, 0)),
                pl.BlockSpec((Cout, 1), lambda b, i: (0, 0)),
            ],
            out_specs=pl.BlockSpec((1, Cout, TH * Wo), lambda b, i: (b, 0, i)),
            scratch_shapes=[pltpu.VMEM((TH * Wo, K * K * Cin), compute_dtype)],
        ),
        compiler_params=pltpu.CompilerParams(
            dimension_semantics=("parallel", "parallel"),
            vmem_limit_bytes=int(vmem_limit)),
    )(x, x, w_mat, b2)

    # Already NCHW-ordered: reshape is free (no HBM transpose).
    return out_flat.reshape(B, Cout, Ho, Wo)


def _reference_conv(x_nchw, weight, bias, padding):
    x = jnp.pad(x_nchw, ((0, 0), (0, 0), (padding, padding), (padding, padding)),
                mode="edge")
    out = lax.conv_general_dilated(
        x, weight, window_strides=(1, 1), padding="VALID",
        dimension_numbers=("NCHW", "OIHW", "NCHW"),
        precision=lax.Precision.HIGHEST)
    return out + bias.reshape(1, -1, 1, 1)


if __name__ == "__main__":
    B, Cin, H, W = 2, 4, 16, 16
    Cout, K, pad = 8, 3, 1

    key = jax.random.PRNGKey(0)
    kx, kw, kb = jax.random.split(key, 3)
    x = jax.random.normal(kx, (B, Cin, H, W), dtype=jnp.float32)
    fan_in = Cin * K * K
    bound = 1.0 / (fan_in ** 0.5)
    weight = jax.random.uniform(kw, (Cout, Cin, K, K), jnp.float32, -bound, bound)
    bias = jax.random.uniform(kb, (Cout,), jnp.float32, -bound, bound)

    ref = _reference_conv(x, weight, bias, pad)

    # float32 path, explicit small row tile -> multi-tile grid (exercises halo).
    out = conv_block_forward(x, weight, bias, padding=pad, row_tile=8)
    out = jax.block_until_ready(out)
    assert out.shape == (B, Cout, H, W)
    assert jnp.allclose(out, ref, atol=1e-2, rtol=1e-2), "f32 kernel mismatch"

    # bf16 MXU path (v6e/v7x fast path), auto-picked row tile.
    out_bf16 = conv_block_forward(x, weight, bias, padding=pad,
                                  compute_dtype=jnp.bfloat16)
    out_bf16 = jax.block_until_ready(out_bf16)
    assert out_bf16.shape == (B, Cout, H, W)
    assert float(jnp.max(jnp.abs(out_bf16 - ref))) < 0.1, "bf16 kernel mismatch"

    print("KERNEL_OK")
</pallas_src>

<mosaic_0001>
module attributes {stable_mosaic.version = 11 : i64} {
  func.func @_conv_block_kernel(%arg0: i32, %arg1: i32, %arg2: memref<1x8x18x4xf32, #tpu.memory_space<vmem>>, %arg3: memref<1x2x18x4xf32, #tpu.memory_space<vmem>>, %arg4: memref<8x36xf32, #tpu.memory_space<vmem>>, %arg5: memref<8x1xf32, #tpu.memory_space<vmem>>, %arg6: memref<1x8x128xf32, #tpu.memory_space<vmem>>, %arg7: memref<128x36xf32, #tpu.memory_space<vmem>>) attributes {dimension_semantics = [#tpu.dimension_semantics<parallel>, #tpu.dimension_semantics<parallel>], iteration_bounds = array<i64: 2, 2>, scalar_prefetch = 0 : i64, scratch_operands = 1 : i64, tpu.core_type = #tpu.core_type<tc>, window_params = [{transform_indices = @transform_0, window_bounds = array<i64: 1, 8, 18, 4>}, {transform_indices = @transform_1, window_bounds = array<i64: 1, 2, 18, 4>}, {pipeline_mode = #tpu.pipeline_mode<synchronous>, transform_indices = @transform_2, window_bounds = array<i64: 8, 36>}, {pipeline_mode = #tpu.pipeline_mode<synchronous>, transform_indices = @transform_3, window_bounds = array<i64: 8, 1>}, {transform_indices = @transform_4, window_bounds = array<i64: 1, 8, 128>}]} {
    %c0 = arith.constant 0 : index
    %c0_0 = arith.constant 0 : index
    %c0_1 = arith.constant 0 : index
    %c0_2 = arith.constant 0 : index
    %0 = vector.load %arg2[%c0, %c0_0, %c0_1, %c0_2] : memref<1x8x18x4xf32, #tpu.memory_space<vmem>>, vector<1x8x18x4xf32>
    %1 = vector.shape_cast %0 : vector<1x8x18x4xf32> to vector<8x18x4xf32>
    %c0_3 = arith.constant 0 : index
    %c0_4 = arith.constant 0 : index
    %c0_5 = arith.constant 0 : index
    %c0_6 = arith.constant 0 : index
    %2 = vector.load %arg3[%c0_3, %c0_4, %c0_5, %c0_6] : memref<1x2x18x4xf32, #tpu.memory_space<vmem>>, vector<1x2x18x4xf32>
    %3 = vector.shape_cast %2 : vector<1x2x18x4xf32> to vector<2x18x4xf32>
    %4 = vector.extract_strided_slice %1 {offsets = [0, 0, 0], sizes = [8, 16, 4], strides = [1, 1, 1]} : vector<8x18x4xf32> to vector<8x16x4xf32>
    %5 = vector.shape_cast %4 : vector<8x16x4xf32> to vector<128x4xf32>
    %c0_7 = arith.constant 0 : index
    %c0_8 = arith.constant 0 : index
    %6 = vector.load %arg7[%c0_7, %c0_8] : memref<128x36xf32, #tpu.memory_space<vmem>>, vector<128x4xf32>
    tpu.vector_store %arg7[%c0_7, %c0_8], %5 {strides = array<i32>} : memref<128x36xf32, #tpu.memory_space<vmem>>, vector<128x4xf32>,
    %7 = vector.extract_strided_slice %1 {offsets = [0, 1, 0], sizes = [8, 16, 4], strides = [1, 1, 1]} : vector<8x18x4xf32> to vector<8x16x4xf32>
    %8 = vector.shape_cast %7 : vector<8x16x4xf32> to vector<128x4xf32>
    %c0_9 = arith.constant 0 : index
    %c4 = arith.constant 4 : index
    %9 = vector.load %arg7[%c0_9, %c4] : memref<128x36xf32, #tpu.memory_space<vmem>>, vector<128x4xf32>
    tpu.vector_store %arg7[%c0_9, %c4], %8 {strides = array<i32>} : memref<128x36xf32, #tpu.memory_space<vmem>>, vector<128x4xf32>,
    %10 = vector.extract_strided_slice %1 {offsets = [0, 2, 0], sizes = [8, 16, 4], strides = [1, 1, 1]} : vector<8x18x4xf32> to vector<8x16x4xf32>
    %11 = vector.shape_cast %10 : vector<8x16x4xf32> to vector<128x4xf32>
    %c0_10 = arith.constant 0 : index
    %c8 = arith.constant 8 : index
    %12 = vector.load %arg7[%c0_10, %c8] : memref<128x36xf32, #tpu.memory_space<vmem>>, vector<128x4xf32>
    tpu.vector_store %arg7[%c0_10, %c8], %11 {strides = array<i32>} : memref<128x36xf32, #tpu.memory_space<vmem>>, vector<128x4xf32>,
    %13 = vector.extract_strided_slice %1 {offsets = [1, 0, 0], sizes = [7, 16, 4], strides = [1, 1, 1]} : vector<8x18x4xf32> to vector<7x16x4xf32>
    %14 = vector.shape_cast %13 : vector<7x16x4xf32> to vector<112x4xf32>
    %c0_11 = arith.constant 0 : index
    %c12 = arith.constant 12 : index
    %15 = vector.load %arg7[%c0_11, %c12] : memref<128x36xf32, #tpu.memory_space<vmem>>, vector<112x4xf32>
    tpu.vector_store %arg7[%c0_11, %c12], %14 {strides = array<i32>} : memref<128x36xf32, #tpu.memory_space<vmem>>, vector<112x4xf32>,
    %16 = vector.extract_strided_slice %3 {offsets = [0, 0, 0], sizes = [1, 16, 4], strides = [1, 1, 1]} : vector<2x18x4xf32> to vector<1x16x4xf32>
    %17 = vector.shape_cast %16 : vector<1x16x4xf32> to vector<16x4xf32>
    %c112 = arith.constant 112 : index
    %c12_12 = arith.constant 12 : index
    %18 = vector.load %arg7[%c112, %c12_12] : memref<128x36xf32, #tpu.memory_space<vmem>>, vector<16x4xf32>
    tpu.vector_store %arg7[%c112, %c12_12], %17 {strides = array<i32>} : memref<128x36xf32, #tpu.memory_space<vmem>>, vector<16x4xf32>,
    %19 = vector.extract_strided_slice %1 {offsets = [1, 1, 0], sizes = [7, 16, 4], strides = [1, 1, 1]} : vector<8x18x4xf32> to vector<7x16x4xf32>
    %20 = vector.shape_cast %19 : vector<7x16x4xf32> to vector<112x4xf32>
    %c0_13 = arith.constant 0 : index
    %c16 = arith.constant 16 : index
    %21 = vector.load %arg7[%c0_13, %c16] : memref<128x36xf32, #tpu.memory_space<vmem>>, vector<112x4xf32>
    tpu.vector_store %arg7[%c0_13, %c16], %20 {strides = array<i32>} : memref<128x36xf32, #tpu.memory_space<vmem>>, vector<112x4xf32>,
    %22 = vector.extract_strided_slice %3 {offsets = [0, 1, 0], sizes = [1, 16, 4], strides = [1, 1, 1]} : vector<2x18x4xf32> to vector<1x16x4xf32>
    %23 = vector.shape_cast %22 : vector<1x16x4xf32> to vector<16x4xf32>
    %c112_14 = arith.constant 112 : index
    %c16_15 = arith.constant 16 : index
    %24 = vector.load %arg7[%c112_14, %c16_15] : memref<128x36xf32, #tpu.memory_space<vmem>>, vector<16x4xf32>
    tpu.vector_store %arg7[%c112_14, %c16_15], %23 {strides = array<i32>} : memref<128x36xf32, #tpu.memory_space<vmem>>, vector<16x4xf32>,
    %25 = vector.extract_strided_slice %1 {offsets = [1, 2, 0], sizes = [7, 16, 4], strides = [1, 1, 1]} : vector<8x18x4xf32> to vector<7x16x4xf32>
    %26 = vector.shape_cast %25 : vector<7x16x4xf32> to vector<112x4xf32>
    %c0_16 = arith.constant 0 : index
    %c20 = arith.constant 20 : index
    %27 = vector.load %arg7[%c0_16, %c20] : memref<128x36xf32, #tpu.memory_space<vmem>>, vector<112x4xf32>
    tpu.vector_store %arg7[%c0_16, %c20], %26 {strides = array<i32>} : memref<128x36xf32, #tpu.memory_space<vmem>>, vector<112x4xf32>,
    %28 = vector.extract_strided_slice %3 {offsets = [0, 2, 0], sizes = [1, 16, 4], strides = [1, 1, 1]} : vector<2x18x4xf32> to vector<1x16x4xf32>
    %29 = vector.shape_cast %28 : vector<1x16x4xf32> to vector<16x4xf32>
    %c112_17 = arith.constant 112 : index
    %c20_18 = arith.constant 20 : index
    %30 = vector.load %arg7[%c112_17, %c20_18] : memref<128x36xf32, #tpu.memory_space<vmem>>, vector<16x4xf32>
    tpu.vector_store %arg7[%c112_17, %c20_18], %29 {strides = array<i32>} : memref<128x36xf32, #tpu.memory_space<vmem>>, vector<16x4xf32>,
    %31 = vector.extract_strided_slice %1 {offsets = [2, 0, 0], sizes = [6, 16, 4], strides = [1, 1, 1]} : vector<8x18x4xf32> to vector<6x16x4xf32>
    %32 = vector.shape_cast %31 : vector<6x16x4xf32> to vector<96x4xf32>
    %c0_19 = arith.constant 0 : index
    %c24 = arith.constant 24 : index
    %33 = vector.load %arg7[%c0_19, %c24] : memref<128x36xf32, #tpu.memory_space<vmem>>, vector<96x4xf32>
    tpu.vector_store %arg7[%c0_19, %c24], %32 {strides = array<i32>} : memref<128x36xf32, #tpu.memory_space<vmem>>, vector<96x4xf32>,
    %34 = vector.extract_strided_slice %3 {offsets = [0, 0, 0], sizes = [2, 16, 4], strides = [1, 1, 1]} : vector<2x18x4xf32> to vector<2x16x4xf32>
    %35 = vector.shape_cast %34 : vector<2x16x4xf32> to vector<32x4xf32>
    %c96 = arith.constant 96 : index
    %c24_20 = arith.constant 24 : index
    %36 = vector.load %arg7[%c96, %c24_20] : memref<128x36xf32, #tpu.memory_space<vmem>>, vector<32x4xf32>
    tpu.vector_store %arg7[%c96, %c24_20], %35 {strides = array<i32>} : memref<128x36xf32, #tpu.memory_space<vmem>>, vector<32x4xf32>,
    %37 = vector.extract_strided_slice %1 {offsets = [2, 1, 0], sizes = [6, 16, 4], strides = [1, 1, 1]} : vector<8x18x4xf32> to vector<6x16x4xf32>
    %38 = vector.shape_cast %37 : vector<6x16x4xf32> to vector<96x4xf32>
    %c0_21 = arith.constant 0 : index
    %c28 = arith.constant 28 : index
    %39 = vector.load %arg7[%c0_21, %c28] : memref<128x36xf32, #tpu.memory_space<vmem>>, vector<96x4xf32>
    tpu.vector_store %arg7[%c0_21, %c28], %38 {strides = array<i32>} : memref<128x36xf32, #tpu.memory_space<vmem>>, vector<96x4xf32>,
    %40 = vector.extract_strided_slice %3 {offsets = [0, 1, 0], sizes = [2, 16, 4], strides = [1, 1, 1]} : vector<2x18x4xf32> to vector<2x16x4xf32>
    %41 = vector.shape_cast %40 : vector<2x16x4xf32> to vector<32x4xf32>
    %c96_22 = arith.constant 96 : index
    %c28_23 = arith.constant 28 : index
    %42 = vector.load %arg7[%c96_22, %c28_23] : memref<128x36xf32, #tpu.memory_space<vmem>>, vector<32x4xf32>
    tpu.vector_store %arg7[%c96_22, %c28_23], %41 {strides = array<i32>} : memref<128x36xf32, #tpu.memory_space<vmem>>, vector<32x4xf32>,
    %43 = vector.extract_strided_slice %1 {offsets = [2, 2, 0], sizes = [6, 16, 4], strides = [1, 1, 1]} : vector<8x18x4xf32> to vector<6x16x4xf32>
    %44 = vector.shape_cast %43 : vector<6x16x4xf32> to vector<96x4xf32>
    %c0_24 = arith.constant 0 : index
    %c32 = arith.constant 32 : index
    %45 = vector.load %arg7[%c0_24, %c32] : memref<128x36xf32, #tpu.memory_space<vmem>>, vector<96x4xf32>
    tpu.vector_store %arg7[%c0_24, %c32], %44 {strides = array<i32>} : memref<128x36xf32, #tpu.memory_space<vmem>>, vector<96x4xf32>,
    %46 = vector.extract_strided_slice %3 {offsets = [0, 2, 0], sizes = [2, 16, 4], strides = [1, 1, 1]} : vector<2x18x4xf32> to vector<2x16x4xf32>
    %47 = vector.shape_cast %46 : vector<2x16x4xf32> to vector<32x4xf32>
    %c96_25 = arith.constant 96 : index
    %c32_26 = arith.constant 32 : index
    %48 = vector.load %arg7[%c96_25, %c32_26] : memref<128x36xf32, #tpu.memory_space<vmem>>, vector<32x4xf32>
    tpu.vector_store %arg7[%c96_25, %c32_26], %47 {strides = array<i32>} : memref<128x36xf32, #tpu.memory_space<vmem>>, vector<32x4xf32>,
    %c0_27 = arith.constant 0 : index
    %c0_28 = arith.constant 0 : index
    %49 = vector.load %arg4[%c0_27, %c0_28] : memref<8x36xf32, #tpu.memory_space<vmem>>, vector<8x36xf32>
    %c0_29 = arith.constant 0 : index
    %c0_30 = arith.constant 0 : index
    %50 = vector.load %arg7[%c0_29, %c0_30] : memref<128x36xf32, #tpu.memory_space<vmem>>, vector<128x36xf32>
    %cst = arith.constant dense<0.000000e+00> : vector<8x128xf32>
    %51 = tpu.matmul %49, %50, %cst {dimension_numbers = #tpu.dot_dimension_numbers<[1], [1], [0], [0], [0, 0, 1, 0], [], []>} : vector<8x36xf32>, vector<128x36xf32>, vector<8x128xf32> -> vector<8x128xf32>
    %c0_31 = arith.constant 0 : index
    %c0_32 = arith.constant 0 : index
    %52 = vector.load %arg5[%c0_31, %c0_32] : memref<8x1xf32, #tpu.memory_space<vmem>>, vector<8x1xf32>
    %53 = vector.broadcast %52 : vector<8x1xf32> to vector<8x128xf32>
    %54 = arith.addf %51, %53 : vector<8x128xf32>
    %c0_33 = arith.constant 0 : index
    %c0_34 = arith.constant 0 : index
    %c0_35 = arith.constant 0 : index
    %55 = vector.load %arg6[%c0_33, %c0_34, %c0_35] : memref<1x8x128xf32, #tpu.memory_space<vmem>>, vector<1x8x128xf32>
    %56 = vector.shape_cast %55 : vector<1x8x128xf32> to vector<8x128xf32>
    %57 = vector.shape_cast %54 : vector<8x128xf32> to vector<1x8x128xf32>
    tpu.vector_store %arg6[%c0_33, %c0_34, %c0_35], %57 {strides = array<i32>} : memref<1x8x128xf32, #tpu.memory_space<vmem>>, vector<1x8x128xf32>,
    return
  }
  func.func @transform_0(%arg0: i32, %arg1: i32) -> (i32, i32, i32, i32) {
    %c0_i32 = arith.constant 0 : i32
    %c0_i32_0 = arith.constant 0 : i32
    %c0_i32_1 = arith.constant 0 : i32
    return %arg0, %arg1, %c0_i32, %c0_i32_0 : i32, i32, i32, i32
  }
  func.func @transform_1(%arg0: i32, %arg1: i32) -> (i32, i32, i32, i32) {
    %c1_i32 = arith.constant 1 : i32
    %0 = arith.addi %arg1, %c1_i32 : i32
    %c4_i32 = arith.constant 4 : i32
    %1 = arith.muli %0, %c4_i32 : i32
    %c0_i32 = arith.constant 0 : i32
    %c0_i32_0 = arith.constant 0 : i32
    %c0_i32_1 = arith.constant 0 : i32
    return %arg0, %1, %c0_i32, %c0_i32_0 : i32, i32, i32, i32
  }
  func.func @transform_2(%arg0: i32, %arg1: i32) -> (i32, i32) {
    %c0_i32 = arith.constant 0 : i32
    %c0_i32_0 = arith.constant 0 : i32
    %c0_i32_1 = arith.constant 0 : i32
    return %c0_i32, %c0_i32_0 : i32, i32
  }
  func.func @transform_3(%arg0: i32, %arg1: i32) -> (i32, i32) {
    %c0_i32 = arith.constant 0 : i32
    %c0_i32_0 = arith.constant 0 : i32
    %c0_i32_1 = arith.constant 0 : i32
    return %c0_i32, %c0_i32_0 : i32, i32
  }
  func.func @transform_4(%arg0: i32, %arg1: i32) -> (i32, i32, i32) {
    %c0_i32 = arith.constant 0 : i32
    %c0_i32_0 = arith.constant 0 : i32
    return %arg0, %c0_i32, %arg1 : i32, i32, i32
  }
}

</mosaic_0001>

<llo_original>
// kernel: tpu_custom_call.1
$region0: #{tpu_custom_call.1}
  #allocation0 [shape = 'u32[]', space=smem, size = 0x4, offset = 0x4, fixed_abs, tag = 'smem constant byte address 0x4 - core index']
  #allocation1 [shape = 'u32[144,128]{1,0:T(1,128)}', space=vmem, size = 0x12000, scoped, tag = 'internal scratch']
  #allocation2 [shape = 'f32[128,36]{1,0:T(8,128)}', space=vmem, size = 0x10000, scoped, tag = 'scratch operand']
  %s0 = inlined_call_operand.vmem [shape: f32[2,18,18,4], index: 0, kind: input, shape index: {}]
  %s1 = inlined_call_operand.vmem [shape: f32[2,18,18,4], index: 1, kind: input, shape index: {}]
  %s2 = inlined_call_operand.vmem [shape: f32[8,36], index: 2, kind: input, shape index: {}]
  %s3 = inlined_call_operand.vmem [shape: f32[8,1], index: 3, kind: input, shape index: {}]
  %s4 = inlined_call_operand.hbm [shape: f32[2,8,256], index: 4, kind: output, shape index: {}]
  %s5 = sld [smem:[#allocation0]]
  $region49: #{tpu_custom_call.1} parent=0
    _
  %s7 = ssub.s32 1, %s5
  %s8 = scalar_select 0, %s7, %s5
  $region1: #{tpu_custom_call.1} parent=0
    #allocation3 [shape = 'u8[8192]{0}', space=vmem, size = 0x2000, scoped, tag = 'output window, operand 0']
    #allocation4 [shape = 's32[2]{0}', space=sflag, size = 0x8, scoped, tag = 'scoped memory for tpu_custom_call.1']
    %9 = vsyncpa [#allocation4], 0
    %s10 = scalar_lea.sflag [#allocation4], 1
    %11 = vsyncpa %s10, 0
    loop: start=0, step=1, limit=6
    $region2: #{tpu_custom_call.1} parent=1 // loop_pre_header
      _
    $region3: #{tpu_custom_call.1} parent=1 // loop_header
      %s13 = sphi 0, %s17
      %p14 = scmp.ge.s32.totalorder %s13, 6
      %s20 = sphi 0, %s32
      %s21 = sphi 0, %s28
      %s22 = sphi 0, %s20
      %s23 = sphi 0, %s21
      %s24 = sphi 0, %s22
      %s25 = sphi 0, %s23
      %s37 = sphi 0, %s39
      %s40 = sphi 0, %s37
      %s41 = sphi 0, %s40
      %s57 = sphi 0, %s41
      %s69 = sphi 0, %s71
      %s72 = sphi 0, %s69
      %s73 = sphi 0, %s72
      %s89 = sphi 0, %s73
      %s93 = sphi 0, %s93
      %s95 = sphi 0, %s93
      %s96 = sphi 0, %s95
      %s110 = sphi 0, %s96
      %s114 = sphi 0, %s114
      %s116 = sphi 0, %s114
      %s117 = sphi 0, %s116
      %s131 = sphi 0, %s117
      %s139 = sphi 0, %s141
      %s142 = sphi 0, %s139
      %s143 = sphi 0, %s142
      %s159 = sphi 0, %s143
    $region4: #{tpu_custom_call.1} parent=1 // loop_header_branch
      %16 = sbr.rel (%p14) target = $region8
    $region5: #{tpu_custom_call.1} parent=1 // loop_body
      %s18 = ssub.s32 %s13, 1
      %s19 = ssub.s32 %s13, 2
      %s26 = sadd.s32 1, %s21
      %p27 = scmp.ge.s32.totalorder %s26, 2
      %s28 = scalar_select %p27, 0, %s26
      %s29 = sadd.s32 1, %s20
      %s30 = scalar_select %p27, %s29, %s20
      %p31 = scmp.ge.s32.totalorder %s30, 2
      %s32 = scalar_select %p31, 0, %s30
      %s33 = ssub.s32 %s20, %s32
      %s34 = ssub.s32 %s21, %s28
      %s35 = sor.u32 %s33, %s34
      %p36 = scmp.eq.s32.totalorder %s35, 0
      %s38 = sadd.s32 %s37, 1
      %s39 = scalar_select %p36, %s37, %s38
      %p42 = pneg %p36
      %p43 = scmp.eq.s32.totalorder %s13, 3
      %p44 = por %p42, %p43
      %p45 = scmp.ne.s32.totalorder %s37, %s40
      %p46 = scmp.eq.s32.totalorder %s13, 0
      %p47 = por %p45, %p46
      %p48 = scmp.ne.s32.totalorder %s37, %s40
      %p49 = scmp.eq.s32.totalorder %s18, 3
      %p50 = por %p48, %p49
      %p51 = scmp.ne.s32.totalorder %s40, %s41
      %p52 = scmp.eq.s32.totalorder %s18, 0
      %p53 = por %p51, %p52
      %p54 = scmp.ne.s32.totalorder %s40, %s41
      %p55 = scmp.eq.s32.totalorder %s19, 3
      %p56 = por %p54, %p55
      %p58 = scmp.ne.s32.totalorder %s41, %s57
      %p59 = scmp.eq.s32.totalorder %s19, 0
      %p60 = por %p58, %p59
      %s61 = sadd.s32 %s21, 1
      %s62 = smul.u32 %s61, 4
      %s63 = sadd.s32 %s28, 1
      %s64 = smul.u32 %s63, 4
      %s65 = ssub.s32 %s20, %s32
      %s66 = ssub.s32 %s62, %s64
      %s67 = sor.u32 %s65, %s66
      %p68 = scmp.eq.s32.totalorder %s67, 0
      %s70 = sadd.s32 %s69, 1
      %s71 = scalar_select %p68, %s69, %s70
      %p74 = pneg %p68
      %p75 = scmp.eq.s32.totalorder %s13, 3
      %p76 = por %p74, %p75
      %p77 = scmp.ne.s32.totalorder %s69, %s72
      %p78 = scmp.eq.s32.totalorder %s13, 0
      %p79 = por %p77, %p78
      %p80 = scmp.ne.s32.totalorder %s69, %s72
      %p81 = scmp.eq.s32.totalorder %s18, 3
      %p82 = por %p80, %p81
      %p83 = scmp.ne.s32.totalorder %s72, %s73
      %p84 = scmp.eq.s32.totalorder %s18, 0
      %p85 = por %p83, %p84
      %p86 = scmp.ne.s32.totalorder %s72, %s73
      %p87 = scmp.eq.s32.totalorder %s19, 3
      %p88 = por %p86, %p87
      %p90 = scmp.ne.s32.totalorder %s73, %s89
      %p91 = scmp.eq.s32.totalorder %s19, 0
      %p92 = por %p90, %p91
      %s94 = sadd.s32 %s93, 1
      %p97 = scmp.eq.s32.totalorder %s13, 3
      %p98 = scmp.ne.s32.totalorder %s93, %s95
      %p99 = scmp.eq.s32.totalorder %s13, 0
      %p100 = por %p98, %p99
      %p101 = scmp.ne.s32.totalorder %s93, %s95
      %p102 = scmp.eq.s32.totalorder %s18, 3
      %p103 = por %p101, %p102
      %p104 = scmp.ne.s32.totalorder %s95, %s96
      %p105 = scmp.eq.s32.totalorder %s18, 0
      %p106 = por %p104, %p105
      %p107 = scmp.ne.s32.totalorder %s95, %s96
      %p108 = scmp.eq.s32.totalorder %s19, 3
      %p109 = por %p107, %p108
      %p111 = scmp.ne.s32.totalorder %s96, %s110
      %p112 = scmp.eq.s32.totalorder %s19, 0
      %p113 = por %p111, %p112
      %s115 = sadd.s32 %s114, 1
      %p118 = scmp.eq.s32.totalorder %s13, 3
      %p119 = scmp.ne.s32.totalorder %s114, %s116
      %p120 = scmp.eq.s32.totalorder %s13, 0
      %p121 = por %p119, %p120
      %p122 = scmp.ne.s32.totalorder %s114, %s116
      %p123 = scmp.eq.s32.totalorder %s18, 3
      %p124 = por %p122, %p123
      %p125 = scmp.ne.s32.totalorder %s116, %s117
      %p126 = scmp.eq.s32.totalorder %s18, 0
      %p127 = por %p125, %p126
      %p128 = scmp.ne.s32.totalorder %s116, %s117
      %p129 = scmp.eq.s32.totalorder %s19, 3
      %p130 = por %p128, %p129
      %p132 = scmp.ne.s32.totalorder %s117, %s131
      %p133 = scmp.eq.s32.totalorder %s19, 0
      %p134 = por %p132, %p133
      %s135 = ssub.s32 %s20, %s32
      %s136 = ssub.s32 %s21, %s28
      %s137 = sor.u32 %s135, %s136
      %p138 = scmp.eq.s32.totalorder %s137, 0
      %s140 = sadd.s32 %s139, 1
      %s141 = scalar_select %p138, %s139, %s140
      %p144 = pneg %p138
      %p145 = scmp.eq.s32.totalorder %s13, 3
      %p146 = por %p144, %p145
      %p147 = scmp.ne.s32.totalorder %s139, %s142
      %p148 = scmp.eq.s32.totalorder %s13, 0
      %p149 = por %p147, %p148
      %p150 = scmp.ne.s32.totalorder %s139, %s142
      %p151 = scmp.eq.s32.totalorder %s18, 3
      %p152 = por %p150, %p151
      %p153 = scmp.ne.s32.totalorder %s142, %s143
      %p154 = scmp.eq.s32.totalorder %s18, 0
      %p155 = por %p153, %p154
      %p156 = scmp.ne.s32.totalorder %s142, %s143
      %p157 = scmp.eq.s32.totalorder %s19, 3
      %p158 = por %p156, %p157
      %p160 = scmp.ne.s32.totalorder %s143, %s159
      %p161 = scmp.eq.s32.totalorder %s19, 0
      %p162 = por %p160, %p161
      %p163 = scmp.le.s32.totalorder 1, %s13
      %p164 = scmp.lt.s32.totalorder %s13, 5
      %p165 = pnand %p163, %p164
      %p166 = pneg %p165
      // Predicated region
      $region9: #{tpu_custom_call.1} parent=5 // pred_check
        _
      $region10: #{tpu_custom_call.1} parent=5 // pred_check_branch
        %168 = sbr.rel (%p165) target = $region12
      $region11: #{tpu_custom_call.1} parent=5 // pred_region
        %s169 = ssub.s32 %s13, 1
        // Predicated region
        $region13: #{tpu_custom_call.1} parent=11 // pred_check
          %p170 = pneg %p106
        $region14: #{tpu_custom_call.1} parent=11 // pred_check_branch
          %172 = sbr.rel (%p170) target = $region16
        $region15: #{tpu_custom_call.1} parent=11 // pred_region
          _
        $region16: #{tpu_custom_call.1} parent=11 // pred_fallthru
          _
        // Predicated region
        $region17: #{tpu_custom_call.1} parent=11 // pred_check
          %p173 = pneg %p127
        $region18: #{tpu_custom_call.1} parent=11 // pred_check_branch
          %175 = sbr.rel (%p173) target = $region20
        $region19: #{tpu_custom_call.1} parent=11 // pred_region
          _
        $region20: #{tpu_custom_call.1} parent=11 // pred_fallthru
          _
      $region12: #{tpu_custom_call.1} parent=5 // pred_fallthru
        _
      %p176 = scmp.lt.s32.totalorder %s13, 4
      // Predicated region
      $region21: #{tpu_custom_call.1} parent=5 // pred_check
        %p177 = pneg %p176
      $region22: #{tpu_custom_call.1} parent=5 // pred_check_branch
        %179 = sbr.rel (%p177) target = $region24
      $region23: #{tpu_custom_call.1} parent=5 // pred_region
        // Predicated region
        $region25: #{tpu_custom_call.1} parent=23 // pred_check
          %p180 = pneg %p47
        $region26: #{tpu_custom_call.1} parent=23 // pred_check_branch
          %182 = sbr.rel (%p180) target = $region28
        $region27: #{tpu_custom_call.1} parent=23 // pred_region
          %s183 = smul.u32 8, %s21
          %s184 = ssub.s32 18, %s183
          %p185 = scmp.lt.s32.totalorder %s184, 8
          %s186 = scalar_select %p185, %s184, 8
          %s187 = smul.u32 128, %s186
          %s188 = smul.u32 %s187, 3
          %p189 = scmp.lt.s32.totalorder %s20, 1
          %s190 = scalar_select %p189, %s20, 1
          %p191 = scmp.lt.s32.totalorder %s183, 17
          %s192 = scalar_select %p191, %s183, 17
          %s193 = smul.addr %s192, 3
          %s194 = smul.addr %s190, 54
          %s195 = sadd.s32 %s193, %s194
          %s196 = smul.addr %s195, 8
          %s197 = scalar_lea.vmem %s0, %s196
          %s198 = smul.u32 8, %s21
          %s199 = ssub.s32 18, %s198
          %p200 = scmp.lt.s32.totalorder %s199, 8
          %s201 = scalar_select %p200, %s199, 8
          %s202 = smul.u32 128, %s201
          %s203 = smul.u32 %s202, 3
        $region28: #{tpu_custom_call.1} parent=23 // pred_fallthru
          _
        // Predicated region
        $region29: #{tpu_custom_call.1} parent=23 // pred_check
          %p204 = pneg %p79
        $region30: #{tpu_custom_call.1} parent=23 // pred_check_branch
          %206 = sbr.rel (%p204) target = $region32
        $region31: #{tpu_custom_call.1} parent=23 // pred_region
          %s207 = sadd.s32 %s21, 1
          %s208 = smul.u32 %s207, 4
          %s209 = smul.u32 2, %s208
          %p210 = scmp.lt.s32.totalorder %s20, 1
          %s211 = scalar_select %p210, %s20, 1
          %p212 = scmp.lt.s32.totalorder %s209, 17
          %s213 = scalar_select %p212, %s209, 17
          %s214 = smul.addr %s213, 3
          %s215 = smul.addr %s211, 54
          %s216 = sadd.s32 %s214, %s215
          %s217 = smul.addr %s216, 8
          %s218 = scalar_lea.vmem %s1, %s217
          %s219 = sadd.s32 %s21, 1
          %s220 = smul.u32 %s219, 4
          %s221 = smul.u32 2, %s220
        $region32: #{tpu_custom_call.1} parent=23 // pred_fallthru
          _
      $region24: #{tpu_custom_call.1} parent=5 // pred_fallthru
        _
      %p222 = scmp.le.s32.totalorder 1, %s13
      %p223 = scmp.lt.s32.totalorder %s13, 5
      %p224 = pnand %p222, %p223
      %p225 = pneg %p224
      // Predicated region
      $region33: #{tpu_custom_call.1} parent=5 // pred_check
        _
      $region34: #{tpu_custom_call.1} parent=5 // pred_check_branch
        %227 = sbr.rel (%p224) target = $region36
      $region35: #{tpu_custom_call.1} parent=5 // pred_region
        %s228 = ssub.s32 %s13, 1
        %s229 = smul.u32 8, %s23
        %s230 = ssub.s32 18, %s229
        %p231 = scmp.lt.s32.totalorder %s230, 8
        %s232 = scalar_select %p231, %s230, 8
        %s233 = smul.u32 128, %s232
        %s234 = smul.u32 %s233, 3
        %p235 = scmp.lt.s32.totalorder %s22, 1
        %s236 = scalar_select %p235, %s22, 1
        %p237 = scmp.lt.s32.totalorder %s229, 17
        %s238 = scalar_select %p237, %s229, 17
        %s239 = smul.addr %s238, 3
        %s240 = smul.addr %s236, 54
        %s241 = sadd.s32 %s239, %s240
        %s242 = smul.addr %s241, 8
        %s243 = scalar_lea.vmem %s0, %s242
        %p244 = pneg %p53
        %p245 = pneg %p50
        %s246 = sadd.s32 %s23, 1
        %s247 = smul.u32 %s246, 4
        %s248 = smul.u32 2, %s247
        %p249 = scmp.lt.s32.totalorder %s22, 1
        %s250 = scalar_select %p249, %s22, 1
        %p251 = scmp.lt.s32.totalorder %s248, 17
        %s252 = scalar_select %p251, %s248, 17
        %s253 = smul.addr %s252, 3
        %s254 = smul.addr %s250, 54
        %s255 = sadd.s32 %s253, %s254
        %s256 = smul.addr %s255, 8
        %s257 = scalar_lea.vmem %s1, %s256
        %p258 = pneg %p85
        %p259 = pneg %p82
        %p260 = pneg %p106
        %p261 = pneg %p103
        %p262 = pneg %p127
        %p263 = pneg %p124
        %p264 = pneg %p155
        %p265 = pneg %p152
        %s266 = sand.u32 %s142, 1
        %s267 = scalar_lea.sflag [#allocation4], %s266
        %s268 = sand.u32 %s142, 1
        %s269 = smul.addr %s268, 8
        %s270 = scalar_lea.vmem [#allocation3], %s269
        %s271 = smul.u32 8, %s23
        %s272 = ssub.s32 18, %s271
        %p273 = scmp.lt.s32.totalorder %s272, 8
        %s274 = scalar_select %p273, %s272, 8
        %s275 = smul.u32 128, %s274
        %s276 = smul.u32 %s275, 3
        %p277 = scmp.lt.s32.totalorder %s22, 1
        %s278 = scalar_select %p277, %s22, 1
        %p279 = scmp.lt.s32.totalorder %s271, 17
        %s280 = scalar_select %p279, %s271, 17
        %s281 = smul.addr %s280, 3
        %s282 = smul.addr %s278, 54
        %s283 = sadd.s32 %s281, %s282
        %s284 = smul.addr %s283, 8
        %s285 = scalar_lea.vmem %s0, %s284
        %s286 = smul.u32 8, %s23
        %s287 = ssub.s32 18, %s286
        %p288 = scmp.lt.s32.totalorder %s287, 8
        %s289 = scalar_select %p288, %s287, 8
        %s290 = smul.u32 128, %s289
        %s291 = smul.u32 %s290, 3
        %s292 = sadd.s32 %s23, 1
        %s293 = smul.u32 %s292, 4
        %s294 = smul.u32 2, %s293
        %p295 = scmp.lt.s32.totalorder %s22, 1
        %s296 = scalar_select %p295, %s22, 1
        %p297 = scmp.lt.s32.totalorder %s294, 17
        %s298 = scalar_select %p297, %s294, 17
        %s299 = smul.addr %s298, 3
        %s300 = smul.addr %s296, 54
        %s301 = sadd.s32 %s299, %s300
        %s302 = smul.addr %s301, 8
        %s303 = scalar_lea.vmem %s1, %s302
        %s304 = sadd.s32 %s23, 1
        %s305 = smul.u32 %s304, 4
        %s306 = smul.u32 2, %s305
        %v307 = vld [vmem:[%s285] sm:$0xff]
        %v308 = vld [vmem:[%s285 + $0x8] sm:$0xff]
        %v309 = vld [vmem:[%s285 + $0x10] sm:$0x3]
        %v310 = vld [vmem:[%s285 + $0x18] sm:$0xff]
        %v311 = vld [vmem:[%s285 + $0x20] sm:$0xff]
        %v312 = vld [vmem:[%s285 + $0x28] sm:$0x3]
        %v313 = vld [vmem:[%s285 + $0x30] sm:$0xff]
        %v314 = vld [vmem:[%s285 + $0x38] sm:$0xff]
        %v315 = vld [vmem:[%s285 + $0x40] sm:$0x3]
        %v316 = vld [vmem:[%s285 + $0x48] sm:$0xff]
        %v317 = vld [vmem:[%s285 + $0x50] sm:$0xff]
        %v318 = vld [vmem:[%s285 + $0x58] sm:$0x3]
        %v319 = vld [vmem:[%s285 + $0x60] sm:$0xff]
        %v320 = vld [vmem:[%s285 + $0x68] sm:$0xff]
        %v321 = vld [vmem:[%s285 + $0x70] sm:$0x3]
        %v322 = vld [vmem:[%s285 + $0x78] sm:$0xff]
        %v323 = vld [vmem:[%s285 + $0x80] sm:$0xff]
        %v324 = vld [vmem:[%s285 + $0x88] sm:$0x3]
        %v325 = vld [vmem:[%s285 + $0x90] sm:$0xff]
        %v326 = vld [vmem:[%s285 + $0x98] sm:$0xff]
        %v327 = vld [vmem:[%s285 + $0xa0] sm:$0x3]
        %v328 = vld [vmem:[%s285 + $0xa8] sm:$0xff]
        %v329 = vld [vmem:[%s285 + $0xb0] sm:$0xff]
        %v330 = vld [vmem:[%s285 + $0xb8] sm:$0x3]
        %v331 = vld [vmem:[%s303] sm:$0xff]
        %v332 = vld [vmem:[%s303 + $0x8] sm:$0xff]
        %v333 = vld [vmem:[%s303 + $0x10] sm:$0x3]
        %v334 = vld [vmem:[%s303 + $0x18] sm:$0xff]
        %v335 = vld [vmem:[%s303 + $0x20] sm:$0xff]
        %v336 = vld [vmem:[%s303 + $0x28] sm:$0x3]
        %vm337 = vcmask 31744
        %338 = vst.msk [vmem:[#allocation2] sm:$0xff] %vm337, %v307
        %339 = vst.msk [vmem:[#allocation2 + $0x8] sm:$0xff] %vm337, %v308
        %340 = vst.msk [vmem:[#allocation2 + $0x10] sm:$0xff] %vm337, %v310
        %341 = vst.msk [vmem:[#allocation2 + $0x18] sm:$0xff] %vm337, %v311
        %342 = vst.msk [vmem:[#allocation2 + $0x20] sm:$0xff] %vm337, %v313
        %343 = vst.msk [vmem:[#allocation2 + $0x28] sm:$0xff] %vm337, %v314
        %344 = vst.msk [vmem:[#allocation2 + $0x30] sm:$0xff] %vm337, %v316
        %345 = vst.msk [vmem:[#allocation2 + $0x38] sm:$0xff] %vm337, %v317
        %346 = vst.msk [vmem:[#allocation2 + $0x40] sm:$0xff] %vm337, %v319
        %347 = vst.msk [vmem:[#allocation2 + $0x48] sm:$0xff] %vm337, %v320
        %348 = vst.msk [vmem:[#allocation2 + $0x50] sm:$0xff] %vm337, %v322
        %349 = vst.msk [vmem:[#allocation2 + $0x58] sm:$0xff] %vm337, %v323
        %350 = vst.msk [vmem:[#allocation2 + $0x60] sm:$0xff] %vm337, %v325
        %351 = vst.msk [vmem:[#allocation2 + $0x68] sm:$0xff] %vm337, %v326
        %352 = vst.msk [vmem:[#allocation2 + $0x70] sm:$0xff] %vm337, %v328
        %353 = vst.msk [vmem:[#allocation2 + $0x78] sm:$0xff] %vm337, %v329
        %vm378 = vcmask 1046528
        %v379 = vrot.slane %v307, 1
        %v380 = vrot.slane %v308, 1
        %v381 = vsel %vm378, %v379, %v380
        %v382 = vrot.slane %v309, 1
        %v383 = vsel %vm378, %v380, %v382
        %v384 = vrot.slane %v310, 1
        %v385 = vrot.slane %v311, 1
        %v386 = vsel %vm378, %v384, %v385
        %v387 = vrot.slane %v312, 1
        %v388 = vsel %vm378, %v385, %v387
        %v389 = vrot.slane %v313, 1
        %v390 = vrot.slane %v314, 1
        %v391 = vsel %vm378, %v389, %v390
        %v392 = vrot.slane %v315, 1
        %v393 = vsel %vm378, %v390, %v392
        %v394 = vrot.slane %v316, 1
        %v395 = vrot.slane %v317, 1
        %v396 = vsel %vm378, %v394, %v395
        %v397 = vrot.slane %v318, 1
        %v398 = vsel %vm378, %v395, %v397
        %v399 = vrot.slane %v319, 1
        %v400 = vrot.slane %v320, 1
        %v401 = vsel %vm378, %v399, %v400
        %v402 = vrot.slane %v321, 1
        %v403 = vsel %vm378, %v400, %v402
        %v404 = vrot.slane %v322, 1
        %v405 = vrot.slane %v323, 1
        %v406 = vsel %vm378, %v404, %v405
        %v407 = vrot.slane %v324, 1
        %v408 = vsel %vm378, %v405, %v407
        %v409 = vrot.slane %v325, 1
        %v410 = vrot.slane %v326, 1
        %v411 = vsel %vm378, %v409, %v410
        %v412 = vrot.slane %v327, 1
        %v413 = vsel %vm378, %v410, %v412
        %v414 = vrot.slane %v328, 1
        %v415 = vrot.slane %v329, 1
        %v416 = vsel %vm378, %v414, %v415
        %v417 = vrot.slane %v330, 1
        %v418 = vsel %vm378, %v415, %v417
        %419 = vrot.lane.b32.xlu0 %v381, 4
        %v420 = vpop.permute.xlu0 %419
        %421 = vrot.lane.b32.xlu0 %v383, 4
        %v422 = vpop.permute.xlu0 %421
        %423 = vrot.lane.b32.xlu0 %v386, 4
        %v424 = vpop.permute.xlu0 %423
        %425 = vrot.lane.b32.xlu0 %v388, 4
        %v426 = vpop.permute.xlu0 %425
        %427 = vrot.lane.b32.xlu0 %v391, 4
        %v428 = vpop.permute.xlu0 %427
        %429 = vrot.lane.b32.xlu0 %v393, 4
        %v430 = vpop.permute.xlu0 %429
        %431 = vrot.lane.b32.xlu0 %v396, 4
        %v432 = vpop.permute.xlu0 %431
        %433 = vrot.lane.b32.xlu0 %v398, 4
        %v434 = vpop.permute.xlu0 %433
        %435 = vrot.lane.b32.xlu0 %v401, 4
        %v436 = vpop.permute.xlu0 %435
        %437 = vrot.lane.b32.xlu0 %v403, 4
        %v438 = vpop.permute.xlu0 %437
        %439 = vrot.lane.b32.xlu0 %v406, 4
        %v440 = vpop.permute.xlu0 %439
        %441 = vrot.lane.b32.xlu0 %v408, 4
        %v442 = vpop.permute.xlu0 %441
        %443 = vrot.lane.b32.xlu0 %v411, 4
        %v444 = vpop.permute.xlu0 %443
        %445 = vrot.lane.b32.xlu0 %v413, 4
        %v446 = vpop.permute.xlu0 %445
        %447 = vrot.lane.b32.xlu0 %v416, 4
        %v448 = vpop.permute.xlu0 %447
        %449 = vrot.lane.b32.xlu0 %v418, 4
        %v450 = vpop.permute.xlu0 %449
        %vm467 = vcmask 64544
        %468 = vst.msk [vmem:[#allocation2] sm:$0xff] %vm467, %v420
        %469 = vst.msk [vmem:[#allocation2 + $0x8] sm:$0xff] %vm467, %v422
        %470 = vst.msk [vmem:[#allocation2 + $0x10] sm:$0xff] %vm467, %v424
        %471 = vst.msk [vmem:[#allocation2 + $0x18] sm:$0xff] %vm467, %v426
        %472 = vst.msk [vmem:[#allocation2 + $0x20] sm:$0xff] %vm467, %v428
        %473 = vst.msk [vmem:[#allocation2 + $0x28] sm:$0xff] %vm467, %v430
        %474 = vst.msk [vmem:[#allocation2 + $0x30] sm:$0xff] %vm467, %v432
        %475 = vst.msk [vmem:[#allocation2 + $0x38] sm:$0xff] %vm467, %v434
        %476 = vst.msk [vmem:[#allocation2 + $0x40] sm:$0xff] %vm467, %v436
        %477 = vst.msk [vmem:[#allocation2 + $0x48] sm:$0xff] %vm467, %v438
        %478 = vst.msk [vmem:[#allocation2 + $0x50] sm:$0xff] %vm467, %v440
        %479 = vst.msk [vmem:[#allocation2 + $0x58] sm:$0xff] %vm467, %v442
        %480 = vst.msk [vmem:[#allocation2 + $0x60] sm:$0xff] %vm467, %v444
        %481 = vst.msk [vmem:[#allocation2 + $0x68] sm:$0xff] %vm467, %v446
        %482 = vst.msk [vmem:[#allocation2 + $0x70] sm:$0xff] %vm467, %v448
        %483 = vst.msk [vmem:[#allocation2 + $0x78] sm:$0xff] %vm467, %v450
        %vm484 = vcmask 1045504
        %v485 = vrot.slane %v307, 2
        %v486 = vrot.slane %v308, 2
        %v487 = vsel %vm484, %v485, %v486
        %v488 = vrot.slane %v309, 2
        %v489 = vsel %vm484, %v486, %v488
        %v490 = vrot.slane %v310, 2
        %v491 = vrot.slane %v311, 2
        %v492 = vsel %vm484, %v490, %v491
        %v493 = vrot.slane %v312, 2
        %v494 = vsel %vm484, %v491, %v493
        %v495 = vrot.slane %v313, 2
        %v496 = vrot.slane %v314, 2
        %v497 = vsel %vm484, %v495, %v496
        %v498 = vrot.slane %v315, 2
        %v499 = vsel %vm484, %v496, %v498
        %v500 = vrot.slane %v316, 2
        %v501 = vrot.slane %v317, 2
        %v502 = vsel %vm484, %v500, %v501
        %v503 = vrot.slane %v318, 2
        %v504 = vsel %vm484, %v501, %v503
        %v505 = vrot.slane %v319, 2
        %v506 = vrot.slane %v320, 2
        %v507 = vsel %vm484, %v505, %v506
        %v508 = vrot.slane %v321, 2
        %v509 = vsel %vm484, %v506, %v508
        %v510 = vrot.slane %v322, 2
        %v511 = vrot.slane %v323, 2
        %v512 = vsel %vm484, %v510, %v511
        %v513 = vrot.slane %v324, 2
        %v514 = vsel %vm484, %v511, %v513
        %v515 = vrot.slane %v325, 2
        %v516 = vrot.slane %v326, 2
        %v517 = vsel %vm484, %v515, %v516
        %v518 = vrot.slane %v327, 2
        %v519 = vsel %vm484, %v516, %v518
        %v520 = vrot.slane %v328, 2
        %v521 = vrot.slane %v329, 2
        %v522 = vsel %vm484, %v520, %v521
        %v523 = vrot.slane %v330, 2
        %v524 = vsel %vm484, %v521, %v523
        %525 = vrot.lane.b32.xlu0 %v487, 8
        %v526 = vpop.permute.xlu0 %525
        %527 = vrot.lane.b32.xlu0 %v489, 8
        %v528 = vpop.permute.xlu0 %527
        %529 = vrot.lane.b32.xlu0 %v492, 8
        %v530 = vpop.permute.xlu0 %529
        %531 = vrot.lane.b32.xlu0 %v494, 8
        %v532 = vpop.permute.xlu0 %531
        %533 = vrot.lane.b32.xlu0 %v497, 8
        %v534 = vpop.permute.xlu0 %533
        %535 = vrot.lane.b32.xlu0 %v499, 8
        %v536 = vpop.permute.xlu0 %535
        %537 = vrot.lane.b32.xlu0 %v502, 8
        %v538 = vpop.permute.xlu0 %537
        %539 = vrot.lane.b32.xlu0 %v504, 8
        %v540 = vpop.permute.xlu0 %539
        %541 = vrot.lane.b32.xlu0 %v507, 8
        %v542 = vpop.permute.xlu0 %541
        %543 = vrot.lane.b32.xlu0 %v509, 8
        %v544 = vpop.permute.xlu0 %543
        %545 = vrot.lane.b32.xlu0 %v512, 8
        %v546 = vpop.permute.xlu0 %545
        %547 = vrot.lane.b32.xlu0 %v514, 8
        %v548 = vpop.permute.xlu0 %547
        %549 = vrot.lane.b32.xlu0 %v517, 8
        %v550 = vpop.permute.xlu0 %549
        %551 = vrot.lane.b32.xlu0 %v519, 8
        %v552 = vpop.permute.xlu0 %551
        %553 = vrot.lane.b32.xlu0 %v522, 8
        %v554 = vpop.permute.xlu0 %553
        %555 = vrot.lane.b32.xlu0 %v524, 8
        %v556 = vpop.permute.xlu0 %555
        %vm573 = vcmask 97344
        %574 = vst.msk [vmem:[#allocation2] sm:$0xff] %vm573, %v526
        %575 = vst.msk [vmem:[#allocation2 + $0x8] sm:$0xff] %vm573, %v528
        %576 = vst.msk [vmem:[#allocation2 + $0x10] sm:$0xff] %vm573, %v530
        %577 = vst.msk [vmem:[#allocation2 + $0x18] sm:$0xff] %vm573, %v532
        %578 = vst.msk [vmem:[#allocation2 + $0x20] sm:$0xff] %vm573, %v534
        %579 = vst.msk [vmem:[#allocation2 + $0x28] sm:$0xff] %vm573, %v536
        %580 = vst.msk [vmem:[#allocation2 + $0x30] sm:$0xff] %vm573, %v538
        %581 = vst.msk [vmem:[#allocation2 + $0x38] sm:$0xff] %vm573, %v540
        %582 = vst.msk [vmem:[#allocation2 + $0x40] sm:$0xff] %vm573, %v542
        %583 = vst.msk [vmem:[#allocation2 + $0x48] sm:$0xff] %vm573, %v544
        %584 = vst.msk [vmem:[#allocation2 + $0x50] sm:$0xff] %vm573, %v546
        %585 = vst.msk [vmem:[#allocation2 + $0x58] sm:$0xff] %vm573, %v548
        %586 = vst.msk [vmem:[#allocation2 + $0x60] sm:$0xff] %vm573, %v550
        %587 = vst.msk [vmem:[#allocation2 + $0x68] sm:$0xff] %vm573, %v552
        %588 = vst.msk [vmem:[#allocation2 + $0x70] sm:$0xff] %vm573, %v554
        %589 = vst.msk [vmem:[#allocation2 + $0x78] sm:$0xff] %vm573, %v556
        %590 = vrot.lane.b32.xlu0 %v310, 12
        %v591 = vpop.permute.xlu0 %590
        %592 = vrot.lane.b32.xlu0 %v311, 12
        %v593 = vpop.permute.xlu0 %592
        %594 = vrot.lane.b32.xlu0 %v313, 12
        %v595 = vpop.permute.xlu0 %594
        %596 = vrot.lane.b32.xlu0 %v314, 12
        %v597 = vpop.permute.xlu0 %596
        %598 = vrot.lane.b32.xlu0 %v316, 12
        %v599 = vpop.permute.xlu0 %598
        %600 = vrot.lane.b32.xlu0 %v317, 12
        %v601 = vpop.permute.xlu0 %600
        %602 = vrot.lane.b32.xlu0 %v319, 12
        %v603 = vpop.permute.xlu0 %602
        %604 = vrot.lane.b32.xlu0 %v320, 12
        %v605 = vpop.permute.xlu0 %604
        %606 = vrot.lane.b32.xlu0 %v322, 12
        %v607 = vpop.permute.xlu0 %606
        %608 = vrot.lane.b32.xlu0 %v323, 12
        %v609 = vpop.permute.xlu0 %608
        %610 = vrot.lane.b32.xlu0 %v325, 12
        %v611 = vpop.permute.xlu0 %610
        %612 = vrot.lane.b32.xlu0 %v326, 12
        %v613 = vpop.permute.xlu0 %612
        %614 = vrot.lane.b32.xlu0 %v328, 12
        %v615 = vpop.permute.xlu0 %614
        %616 = vrot.lane.b32.xlu0 %v329, 12
        %v617 = vpop.permute.xlu0 %616
        %vm632 = vcmask 130144
        %633 = vst.msk [vmem:[#allocation2] sm:$0xff] %vm632, %v591
        %634 = vst.msk [vmem:[#allocation2 + $0x8] sm:$0xff] %vm632, %v593
        %635 = vst.msk [vmem:[#allocation2 + $0x10] sm:$0xff] %vm632, %v595
        %636 = vst.msk [vmem:[#allocation2 + $0x18] sm:$0xff] %vm632, %v597
        %637 = vst.msk [vmem:[#allocation2 + $0x20] sm:$0xff] %vm632, %v599
        %638 = vst.msk [vmem:[#allocation2 + $0x28] sm:$0xff] %vm632, %v601
        %639 = vst.msk [vmem:[#allocation2 + $0x30] sm:$0xff] %vm632, %v603
        %640 = vst.msk [vmem:[#allocation2 + $0x38] sm:$0xff] %vm632, %v605
        %641 = vst.msk [vmem:[#allocation2 + $0x40] sm:$0xff] %vm632, %v607
        %642 = vst.msk [vmem:[#allocation2 + $0x48] sm:$0xff] %vm632, %v609
        %643 = vst.msk [vmem:[#allocation2 + $0x50] sm:$0xff] %vm632, %v611
        %644 = vst.msk [vmem:[#allocation2 + $0x58] sm:$0xff] %vm632, %v613
        %645 = vst.msk [vmem:[#allocation2 + $0x60] sm:$0xff] %vm632, %v615
        %646 = vst.msk [vmem:[#allocation2 + $0x68] sm:$0xff] %vm632, %v617
        %649 = vrot.lane.b32.xlu0 %v331, 12
        %v650 = vpop.permute.xlu0 %649
        %651 = vrot.lane.b32.xlu0 %v332, 12
        %v652 = vpop.permute.xlu0 %651
        %655 = vst.msk [vmem:[#allocation2 + $0x70] sm:$0xff] %vm632, %v650
        %656 = vst.msk [vmem:[#allocation2 + $0x78] sm:$0xff] %vm632, %v652
        %657 = vrot.lane.b32.xlu0 %v386, 16
        %v658 = vpop.permute.xlu0 %657
        %659 = vrot.lane.b32.xlu0 %v388, 16
        %v660 = vpop.permute.xlu0 %659
        %661 = vrot.lane.b32.xlu0 %v391, 16
        %v662 = vpop.permute.xlu0 %661
        %663 = vrot.lane.b32.xlu0 %v393, 16
        %v664 = vpop.permute.xlu0 %663
        %665 = vrot.lane.b32.xlu0 %v396, 16
        %v666 = vpop.permute.xlu0 %665
        %667 = vrot.lane.b32.xlu0 %v398, 16
        %v668 = vpop.permute.xlu0 %667
        %669 = vrot.lane.b32.xlu0 %v401, 16
        %v670 = vpop.permute.xlu0 %669
        %671 = vrot.lane.b32.xlu0 %v403, 16
        %v672 = vpop.permute.xlu0 %671
        %673 = vrot.lane.b32.xlu0 %v406, 16
        %v674 = vpop.permute.xlu0 %673
        %675 = vrot.lane.b32.xlu0 %v408, 16
        %v676 = vpop.permute.xlu0 %675
        %677 = vrot.lane.b32.xlu0 %v411, 16
        %v678 = vpop.permute.xlu0 %677
        %679 = vrot.lane.b32.xlu0 %v413, 16
        %v680 = vpop.permute.xlu0 %679
        %681 = vrot.lane.b32.xlu0 %v416, 16
        %v682 = vpop.permute.xlu0 %681
        %683 = vrot.lane.b32.xlu0 %v418, 16
        %v684 = vpop.permute.xlu0 %683
        %vm699 = vcmask 162944
        %700 = vst.msk [vmem:[#allocation2] sm:$0xff] %vm699, %v658
        %701 = vst.msk [vmem:[#allocation2 + $0x8] sm:$0xff] %vm699, %v660
        %702 = vst.msk [vmem:[#allocation2 + $0x10] sm:$0xff] %vm699, %v662
        %703 = vst.msk [vmem:[#allocation2 + $0x18] sm:$0xff] %vm699, %v664
        %704 = vst.msk [vmem:[#allocation2 + $0x20] sm:$0xff] %vm699, %v666
        %705 = vst.msk [vmem:[#allocation2 + $0x28] sm:$0xff] %vm699, %v668
        %706 = vst.msk [vmem:[#allocation2 + $0x30] sm:$0xff] %vm699, %v670
        %707 = vst.msk [vmem:[#allocation2 + $0x38] sm:$0xff] %vm699, %v672
        %708 = vst.msk [vmem:[#allocation2 + $0x40] sm:$0xff] %vm699, %v674
        %709 = vst.msk [vmem:[#allocation2 + $0x48] sm:$0xff] %vm699, %v676
        %710 = vst.msk [vmem:[#allocation2 + $0x50] sm:$0xff] %vm699, %v678
        %711 = vst.msk [vmem:[#allocation2 + $0x58] sm:$0xff] %vm699, %v680
        %712 = vst.msk [vmem:[#allocation2 + $0x60] sm:$0xff] %vm699, %v682
        %713 = vst.msk [vmem:[#allocation2 + $0x68] sm:$0xff] %vm699, %v684
        %715 = vrot.lane.b32.xlu0 %v331, 16
        %v716 = vpop.permute.xlu0 %715
        %717 = vrot.lane.b32.xlu0 %v332, 16
        %v718 = vpop.permute.xlu0 %717
        %719 = vrot.lane.b32.xlu0 %v333, 16
        %v720 = vpop.permute.xlu0 %719
        %vm724 = vcmask 162945
        %725 = vst.msk [vmem:[#allocation2 + $0x6f] sm:$0xfe] %vm724, %v716
        %726 = vst.msk [vmem:[#allocation2 + $0x77] sm:$0xff] %vm699, %v718
        %vm727 = vcmask 155776
        %728 = vst.msk [vmem:[#allocation2 + $0x7f] sm:$0x1] %vm727, %v720
        %729 = vrot.lane.b32.xlu0 %v492, 20
        %v730 = vpop.permute.xlu0 %729
        %731 = vrot.lane.b32.xlu0 %v494, 20
        %v732 = vpop.permute.xlu0 %731
        %733 = vrot.lane.b32.xlu0 %v497, 20
        %v734 = vpop.permute.xlu0 %733
        %735 = vrot.lane.b32.xlu0 %v499, 20
        %v736 = vpop.permute.xlu0 %735
        %737 = vrot.lane.b32.xlu0 %v502, 20
        %v738 = vpop.permute.xlu0 %737
        %739 = vrot.lane.b32.xlu0 %v504, 20
        %v740 = vpop.permute.xlu0 %739
        %741 = vrot.lane.b32.xlu0 %v507, 20
        %v742 = vpop.permute.xlu0 %741
        %743 = vrot.lane.b32.xlu0 %v509, 20
        %v744 = vpop.permute.xlu0 %743
        %745 = vrot.lane.b32.xlu0 %v512, 20
        %v746 = vpop.permute.xlu0 %745
        %747 = vrot.lane.b32.xlu0 %v514, 20
        %v748 = vpop.permute.xlu0 %747
        %749 = vrot.lane.b32.xlu0 %v517, 20
        %v750 = vpop.permute.xlu0 %749
        %751 = vrot.lane.b32.xlu0 %v519, 20
        %v752 = vpop.permute.xlu0 %751
        %753 = vrot.lane.b32.xlu0 %v522, 20
        %v754 = vpop.permute.xlu0 %753
        %755 = vrot.lane.b32.xlu0 %v524, 20
        %v756 = vpop.permute.xlu0 %755
        %vm771 = vcmask 195744
        %772 = vst.msk [vmem:[#allocation2] sm:$0xff] %vm771, %v730
        %773 = vst.msk [vmem:[#allocation2 + $0x8] sm:$0xff] %vm771, %v732
        %774 = vst.msk [vmem:[#allocation2 + $0x10] sm:$0xff] %vm771, %v734
        %775 = vst.msk [vmem:[#allocation2 + $0x18] sm:$0xff] %vm771, %v736
        %776 = vst.msk [vmem:[#allocation2 + $0x20] sm:$0xff] %vm771, %v738
        %777 = vst.msk [vmem:[#allocation2 + $0x28] sm:$0xff] %vm771, %v740
        %778 = vst.msk [vmem:[#allocation2 + $0x30] sm:$0xff] %vm771, %v742
        %779 = vst.msk [vmem:[#allocation2 + $0x38] sm:$0xff] %vm771, %v744
        %780 = vst.msk [vmem:[#allocation2 + $0x40] sm:$0xff] %vm771, %v746
        %781 = vst.msk [vmem:[#allocation2 + $0x48] sm:$0xff] %vm771, %v748
        %782 = vst.msk [vmem:[#allocation2 + $0x50] sm:$0xff] %vm771, %v750
        %783 = vst.msk [vmem:[#allocation2 + $0x58] sm:$0xff] %vm771, %v752
        %784 = vst.msk [vmem:[#allocation2 + $0x60] sm:$0xff] %vm771, %v754
        %785 = vst.msk [vmem:[#allocation2 + $0x68] sm:$0xff] %vm771, %v756
        %786 = vrot.lane.b32.xlu0 %v331, 20
        %v787 = vpop.permute.xlu0 %786
        %788 = vrot.lane.b32.xlu0 %v332, 20
        %v789 = vpop.permute.xlu0 %788
        %790 = vrot.lane.b32.xlu0 %v333, 20
        %v791 = vpop.permute.xlu0 %790
        %vm795 = vcmask 195746
        %796 = vst.msk [vmem:[#allocation2 + $0x6e] sm:$0xfc] %vm795, %v787
        %797 = vst.msk [vmem:[#allocation2 + $0x76] sm:$0xff] %vm771, %v789
        %vm798 = vcmask 189600
        %799 = vst.msk [vmem:[#allocation2 + $0x7e] sm:$0x3] %vm798, %v791
        %800 = vrot.lane.b32.xlu0 %v313, 24
        %v801 = vpop.permute.xlu0 %800
        %802 = vrot.lane.b32.xlu0 %v314, 24
        %v803 = vpop.permute.xlu0 %802
        %804 = vrot.lane.b32.xlu0 %v316, 24
        %v805 = vpop.permute.xlu0 %804
        %806 = vrot.lane.b32.xlu0 %v317, 24
        %v807 = vpop.permute.xlu0 %806
        %808 = vrot.lane.b32.xlu0 %v319, 24
        %v809 = vpop.permute.xlu0 %808
        %810 = vrot.lane.b32.xlu0 %v320, 24
        %v811 = vpop.permute.xlu0 %810
        %812 = vrot.lane.b32.xlu0 %v322, 24
        %v813 = vpop.permute.xlu0 %812
        %814 = vrot.lane.b32.xlu0 %v323, 24
        %v815 = vpop.permute.xlu0 %814
        %816 = vrot.lane.b32.xlu0 %v325, 24
        %v817 = vpop.permute.xlu0 %816
        %818 = vrot.lane.b32.xlu0 %v326, 24
        %v819 = vpop.permute.xlu0 %818
        %820 = vrot.lane.b32.xlu0 %v328, 24
        %v821 = vpop.permute.xlu0 %820
        %822 = vrot.lane.b32.xlu0 %v329, 24
        %v823 = vpop.permute.xlu0 %822
        %vm836 = vcmask 228544
        %837 = vst.msk [vmem:[#allocation2] sm:$0xff] %vm836, %v801
        %838 = vst.msk [vmem:[#allocation2 + $0x8] sm:$0xff] %vm836, %v803
        %839 = vst.msk [vmem:[#allocation2 + $0x10] sm:$0xff] %vm836, %v805
        %840 = vst.msk [vmem:[#allocation2 + $0x18] sm:$0xff] %vm836, %v807
        %841 = vst.msk [vmem:[#allocation2 + $0x20] sm:$0xff] %vm836, %v809
        %842 = vst.msk [vmem:[#allocation2 + $0x28] sm:$0xff] %vm836, %v811
        %843 = vst.msk [vmem:[#allocation2 + $0x30] sm:$0xff] %vm836, %v813
        %844 = vst.msk [vmem:[#allocation2 + $0x38] sm:$0xff] %vm836, %v815
        %845 = vst.msk [vmem:[#allocation2 + $0x40] sm:$0xff] %vm836, %v817
        %846 = vst.msk [vmem:[#allocation2 + $0x48] sm:$0xff] %vm836, %v819
        %847 = vst.msk [vmem:[#allocation2 + $0x50] sm:$0xff] %vm836, %v821
        %848 = vst.msk [vmem:[#allocation2 + $0x58] sm:$0xff] %vm836, %v823
        %851 = vrot.lane.b32.xlu0 %v331, 24
        %v852 = vpop.permute.xlu0 %851
        %853 = vrot.lane.b32.xlu0 %v332, 24
        %v854 = vpop.permute.xlu0 %853
        %855 = vrot.lane.b32.xlu0 %v334, 24
        %v856 = vpop.permute.xlu0 %855
        %857 = vrot.lane.b32.xlu0 %v335, 24
        %v858 = vpop.permute.xlu0 %857
        %863 = vst.msk [vmem:[#allocation2 + $0x60] sm:$0xff] %vm836, %v852
        %864 = vst.msk [vmem:[#allocation2 + $0x68] sm:$0xff] %vm836, %v854
        %865 = vst.msk [vmem:[#allocation2 + $0x70] sm:$0xff] %vm836, %v856
        %866 = vst.msk [vmem:[#allocation2 + $0x78] sm:$0xff] %vm836, %v858
        %867 = vrot.lane.b32.xlu0 %v391, 28
        %v868 = vpop.permute.xlu0 %867
        %869 = vrot.lane.b32.xlu0 %v393, 28
        %v870 = vpop.permute.xlu0 %869
        %871 = vrot.lane.b32.xlu0 %v396, 28
        %v872 = vpop.permute.xlu0 %871
        %873 = vrot.lane.b32.xlu0 %v398, 28
        %v874 = vpop.permute.xlu0 %873
        %875 = vrot.lane.b32.xlu0 %v401, 28
        %v876 = vpop.permute.xlu0 %875
        %877 = vrot.lane.b32.xlu0 %v403, 28
        %v878 = vpop.permute.xlu0 %877
        %879 = vrot.lane.b32.xlu0 %v406, 28
        %v880 = vpop.permute.xlu0 %879
        %881 = vrot.lane.b32.xlu0 %v408, 28
        %v882 = vpop.permute.xlu0 %881
        %883 = vrot.lane.b32.xlu0 %v411, 28
        %v884 = vpop.permute.xlu0 %883
        %885 = vrot.lane.b32.xlu0 %v413, 28
        %v886 = vpop.permute.xlu0 %885
        %887 = vrot.lane.b32.xlu0 %v416, 28
        %v888 = vpop.permute.xlu0 %887
        %889 = vrot.lane.b32.xlu0 %v418, 28
        %v890 = vpop.permute.xlu0 %889
        %vm903 = vcmask 261344
        %904 = vst.msk [vmem:[#allocation2] sm:$0xff] %vm903, %v868
        %905 = vst.msk [vmem:[#allocation2 + $0x8] sm:$0xff] %vm903, %v870
        %906 = vst.msk [vmem:[#allocation2 + $0x10] sm:$0xff] %vm903, %v872
        %907 = vst.msk [vmem:[#allocation2 + $0x18] sm:$0xff] %vm903, %v874
        %908 = vst.msk [vmem:[#allocation2 + $0x20] sm:$0xff] %vm903, %v876
        %909 = vst.msk [vmem:[#allocation2 + $0x28] sm:$0xff] %vm903, %v878
        %910 = vst.msk [vmem:[#allocation2 + $0x30] sm:$0xff] %vm903, %v880
        %911 = vst.msk [vmem:[#allocation2 + $0x38] sm:$0xff] %vm903, %v882
        %912 = vst.msk [vmem:[#allocation2 + $0x40] sm:$0xff] %vm903, %v884
        %913 = vst.msk [vmem:[#allocation2 + $0x48] sm:$0xff] %vm903, %v886
        %914 = vst.msk [vmem:[#allocation2 + $0x50] sm:$0xff] %vm903, %v888
        %915 = vst.msk [vmem:[#allocation2 + $0x58] sm:$0xff] %vm903, %v890
        %v917 = vrot.slane %v331, 1
        %v918 = vrot.slane %v332, 1
        %v919 = vsel %vm378, %v917, %v918
        %v920 = vrot.slane %v333, 1
        %v921 = vsel %vm378, %v918, %v920
        %v922 = vrot.slane %v334, 1
        %v923 = vrot.slane %v335, 1
        %v924 = vsel %vm378, %v922, %v923
        %v925 = vrot.slane %v336, 1
        %v926 = vsel %vm378, %v923, %v925
        %927 = vrot.lane.b32.xlu0 %v919, 28
        %v928 = vpop.permute.xlu0 %927
        %929 = vrot.lane.b32.xlu0 %v921, 28
        %v930 = vpop.permute.xlu0 %929
        %931 = vrot.lane.b32.xlu0 %v924, 28
        %v932 = vpop.permute.xlu0 %931
        %933 = vrot.lane.b32.xlu0 %v926, 28
        %v934 = vpop.permute.xlu0 %933
        %939 = vst.msk [vmem:[#allocation2 + $0x60] sm:$0xff] %vm903, %v928
        %940 = vst.msk [vmem:[#allocation2 + $0x68] sm:$0xff] %vm903, %v930
        %941 = vst.msk [vmem:[#allocation2 + $0x70] sm:$0xff] %vm903, %v932
        %942 = vst.msk [vmem:[#allocation2 + $0x78] sm:$0xff] %vm903, %v934
        %943 = vrot.lane.b32.xlu0 %v497, 32
        %v944 = vpop.permute.xlu0 %943
        %945 = vrot.lane.b32.xlu0 %v499, 32
        %v946 = vpop.permute.xlu0 %945
        %947 = vrot.lane.b32.xlu0 %v502, 32
        %v948 = vpop.permute.xlu0 %947
        %949 = vrot.lane.b32.xlu0 %v504, 32
        %v950 = vpop.permute.xlu0 %949
        %951 = vrot.lane.b32.xlu0 %v507, 32
        %v952 = vpop.permute.xlu0 %951
        %953 = vrot.lane.b32.xlu0 %v509, 32
        %v954 = vpop.permute.xlu0 %953
        %955 = vrot.lane.b32.xlu0 %v512, 32
        %v956 = vpop.permute.xlu0 %955
        %957 = vrot.lane.b32.xlu0 %v514, 32
        %v958 = vpop.permute.xlu0 %957
        %959 = vrot.lane.b32.xlu0 %v517, 32
        %v960 = vpop.permute.xlu0 %959
        %961 = vrot.lane.b32.xlu0 %v519, 32
        %v962 = vpop.permute.xlu0 %961
        %963 = vrot.lane.b32.xlu0 %v522, 32
        %v964 = vpop.permute.xlu0 %963
        %965 = vrot.lane.b32.xlu0 %v524, 32
        %v966 = vpop.permute.xlu0 %965
        %vm979 = vcmask 294144
        %980 = vst.msk [vmem:[#allocation2] sm:$0xff] %vm979, %v944
        %981 = vst.msk [vmem:[#allocation2 + $0x8] sm:$0xff] %vm979, %v946
        %982 = vst.msk [vmem:[#allocation2 + $0x10] sm:$0xff] %vm979, %v948
        %983 = vst.msk [vmem:[#allocation2 + $0x18] sm:$0xff] %vm979, %v950
        %984 = vst.msk [vmem:[#allocation2 + $0x20] sm:$0xff] %vm979, %v952
        %985 = vst.msk [vmem:[#allocation2 + $0x28] sm:$0xff] %vm979, %v954
        %986 = vst.msk [vmem:[#allocation2 + $0x30] sm:$0xff] %vm979, %v956
        %987 = vst.msk [vmem:[#allocation2 + $0x38] sm:$0xff] %vm979, %v958
        %988 = vst.msk [vmem:[#allocation2 + $0x40] sm:$0xff] %vm979, %v960
        %989 = vst.msk [vmem:[#allocation2 + $0x48] sm:$0xff] %vm979, %v962
        %990 = vst.msk [vmem:[#allocation2 + $0x50] sm:$0xff] %vm979, %v964
        %991 = vst.msk [vmem:[#allocation2 + $0x58] sm:$0xff] %vm979, %v966
        %v992 = vrot.slane %v331, 2
        %v993 = vrot.slane %v332, 2
        %v994 = vsel %vm484, %v992, %v993
        %v995 = vrot.slane %v333, 2
        %v996 = vsel %vm484, %v993, %v995
        %v997 = vrot.slane %v334, 2
        %v998 = vrot.slane %v335, 2
        %v999 = vsel %vm484, %v997, %v998
        %v1000 = vrot.slane %v336, 2
        %v1001 = vsel %vm484, %v998, %v1000
        %1002 = vrot.lane.b32.xlu0 %v994, 32
        %v1003 = vpop.permute.xlu0 %1002
        %1004 = vrot.lane.b32.xlu0 %v996, 32
        %v1005 = vpop.permute.xlu0 %1004
        %1006 = vrot.lane.b32.xlu0 %v999, 32
        %v1007 = vpop.permute.xlu0 %1006
        %1008 = vrot.lane.b32.xlu0 %v1001, 32
        %v1009 = vpop.permute.xlu0 %1008
        %1014 = vst.msk [vmem:[#allocation2 + $0x60] sm:$0xff] %vm979, %v1003
        %1015 = vst.msk [vmem:[#allocation2 + $0x68] sm:$0xff] %vm979, %v1005
        %1016 = vst.msk [vmem:[#allocation2 + $0x70] sm:$0xff] %vm979, %v1007
        %1017 = vst.msk [vmem:[#allocation2 + $0x78] sm:$0xff] %vm979, %v1009
        %v1018 = vld [vmem:[%s2] sm:$0xff]
        %v1019 = vld [vmem:[#allocation2] sm:$0xff]
        %v1020 = vld [vmem:[#allocation2 + $0x8] sm:$0xff]
        %v1021 = vld [vmem:[#allocation2 + $0x10] sm:$0xff]
        %v1022 = vld [vmem:[#allocation2 + $0x18] sm:$0xff]
        %v1023 = vld [vmem:[#allocation2 + $0x20] sm:$0xff]
        %v1024 = vld [vmem:[#allocation2 + $0x28] sm:$0xff]
        %v1025 = vld [vmem:[#allocation2 + $0x30] sm:$0xff]
        %v1026 = vld [vmem:[#allocation2 + $0x38] sm:$0xff]
        %v1027 = vld [vmem:[#allocation2 + $0x40] sm:$0xff]
        %v1028 = vld [vmem:[#allocation2 + $0x48] sm:$0xff]
        %v1029 = vld [vmem:[#allocation2 + $0x50] sm:$0xff]
        %v1030 = vld [vmem:[#allocation2 + $0x58] sm:$0xff]
        %v1031 = vld [vmem:[#allocation2 + $0x60] sm:$0xff]
        %v1032 = vld [vmem:[#allocation2 + $0x68] sm:$0xff]
        %v1033 = vld [vmem:[#allocation2 + $0x70] sm:$0xff]
        %v1034 = vld [vmem:[#allocation2 + $0x78] sm:$0xff]
        %v1035 = vld [vmem:[%s3] sm:$0xff]
        %1037 = vset.pattern.permute.xlu0 0
        %1038 = vperm.xlu0 %1037, %v1035
        %v1039 = vpop.permute.xlu0 %1038
        %vm1041 = vcmask 293888
        %v1043 = vsel %vm1041, %v1018, 0
        %v1046 = vsel %vm1041, %v1019, 0
        %v1049 = vsel %vm1041, %v1020, 0
        %v1052 = vsel %vm1041, %v1021, 0
        %v1055 = vsel %vm1041, %v1022, 0
        %v1058 = vsel %vm1041, %v1023, 0
        %v1061 = vsel %vm1041, %v1024, 0
        %v1064 = vsel %vm1041, %v1025, 0
        %v1067 = vsel %vm1041, %v1026, 0
        %v1070 = vsel %vm1041, %v1027, 0
        %v1073 = vsel %vm1041, %v1028, 0
        %v1076 = vsel %vm1041, %v1029, 0
        %v1079 = vsel %vm1041, %v1030, 0
        %v1082 = vsel %vm1041, %v1031, 0
        %v1085 = vsel %vm1041, %v1032, 0
        %v1088 = vsel %vm1041, %v1033, 0
        %v1091 = vsel %vm1041, %v1034, 0
        %1093 = vmatprep.subr.mxu0 0.0
        %1094 = vmatpush1.xpose.msra.mxu0 %v1046
        %1095 = vmatprep.subr.mxu0 0.0
        %1096 = vmatpush1.xpose.msra.mxu0 %v1049
        %1097 = vmatprep.subr.mxu0 0.0
        %1098 = vmatpush1.xpose.msra.mxu0 %v1052
        %1099 = vmatprep.subr.mxu0 0.0
        %1100 = vmatpush1.xpose.msra.mxu0 %v1055
        %1101 = vmatprep.subr.mxu0 0.0
        %1102 = vmatpush1.xpose.msra.mxu0 %v1058
        %1103 = vmatprep.subr.mxu0 0.0
        %1104 = vmatpush1.xpose.msra.mxu0 %v1061
        %1105 = vmatprep.subr.mxu0 0.0
        %1106 = vmatpush1.xpose.msra.mxu0 %v1064
        %1107 = vmatprep.subr.mxu0 0.0
        %1108 = vmatpush1.xpose.msra.mxu0 %v1067
        %1109 = vmatprep.subr.mxu0 0.0
        %1110 = vmatpush1.xpose.msra.mxu0 %v1070
        %1111 = vmatprep.subr.mxu0 0.0
        %1112 = vmatpush1.xpose.msra.mxu0 %v1073
        %1113 = vmatprep.subr.mxu0 0.0
        %1114 = vmatpush1.xpose.msra.mxu0 %v1076
        %1115 = vmatprep.subr.mxu0 0.0
        %1116 = vmatpush1.xpose.msra.mxu0 %v1079
        %1117 = vmatprep.subr.mxu0 0.0
        %1118 = vmatpush1.xpose.msra.mxu0 %v1082
        %1119 = vmatprep.subr.mxu0 0.0
        %1120 = vmatpush1.xpose.msra.mxu0 %v1085
        %1121 = vmatprep.subr.mxu0 0.0
        %1122 = vmatpush1.xpose.msra.mxu0 %v1088
        %1123 = vmatprep.subr.mxu0 0.0
        %1124 = vmatpush1.xpose.msra.mxu0 %v1091
        %1125 = vmatprep.subr.mxu0 0.0
        %1126 = vmatpush1.xpose.msra.mxu0 0.0
        %1127 = vmatprep.subr.mxu0 0.0
        %1128 = vmatpush1.xpose.msra.mxu0 0.0
        %1129 = vmatprep.subr.mxu0 0.0
        %1130 = vmatpush1.xpose.msra.mxu0 0.0
        %1131 = vmatprep.subr.mxu0 0.0
        %1132 = vmatpush1.xpose.msra.mxu0 0.0
        %1133 = vmatprep.subr.mxu0 0.0
        %1134 = vmatpush1.xpose.msra.mxu0 0.0
        %1135 = vmatprep.subr.mxu0 0.0
        %1136 = vmatpush1.xpose.msra.mxu0 0.0
        %1137 = vmatprep.subr.mxu0 0.0
        %1138 = vmatpush1.xpose.msra.mxu0 0.0
        %1139 = vmatprep.subr.mxu0 0.0
        %1140 = vmatpush1.xpose.msra.mxu0 0.0
        %1141 = vmatprep.subr.mxu0 0.0
        %1142 = vmatpush1.xpose.msra.mxu0 0.0
        %1143 = vmatprep.subr.mxu0 0.0
        %1144 = vmatpush1.xpose.msra.mxu0 0.0
        %1145 = vmatprep.subr.mxu0 0.0
        %1146 = vmatpush1.xpose.msra.mxu0 0.0
        %1147 = vmatprep.subr.mxu0 0.0
        %1148 = vmatpush1.xpose.msra.mxu0 0.0
        %1149 = vmatprep.subr.mxu0 0.0
        %1150 = vmatpush1.xpose.msra.mxu0 0.0
        %1151 = vmatprep.subr.mxu0 0.0
        %1152 = vmatpush1.xpose.msra.mxu0 0.0
        %1153 = vmatprep.subr.mxu0 0.0
        %1154 = vmatpush1.xpose.msra.mxu0 0.0
        %1155 = vmatprep.subr.mxu0 0.0
        %1156 = vmatpush1.xpose.msra.mxu0 0.0
        %1157 = vmatprep.mubr.f32.mxu0 0.0
        %1158 = vmatmul.mubr.f32.gmra.mrb[0].mxu0 %v1043
        %v1159 = vpop.f32.mrb[0].mxu0
        %v1160 = vadd.f32 %v1039, %v1159
        %v1161 = vpop.f32.mrb[0].mxu0
        %1162 = vdwg.mxu0
        %1163 = vst [vmem:[%s270] sm:$0xff] %v1160
        %s1164 = sand.u32 %s142, 1
        %s1165 = scalar_lea.sflag [#allocation4], %s1164
        %s1166 = sand.u32 %s142, 1
        %s1167 = smul.addr %s1166, 8
        %s1168 = scalar_lea.vmem [#allocation3], %s1167
        // Predicated region
        $region37: #{tpu_custom_call.1} parent=35 // pred_check
          %p1169 = pneg %p152
        $region38: #{tpu_custom_call.1} parent=35 // pred_check_branch
          %1171 = sbr.rel (%p1169) target = $region40
        $region39: #{tpu_custom_call.1} parent=35 // pred_region
          %s1173 = ssub.s32 128, 128
          %1174 = vsyncadd %s1165, %s1173
          %s1175 = smul.addr %s22, 2
          %s1176 = sadd.s32 %s23, %s1175
          %s1177 = smul.addr %s1176, 128
          %s1178 = scalar_lea.hbm %s4, %s1177
          %s1180 = sshll.u32 %s1168, 4
          %s1181 = int_to_ptr.vmem [resolvable:$true] %s1180
          %1183 = dma.vmem_to_hbm [thread:$0]  %s1181, 128, %s1178, %s1165
        $region40: #{tpu_custom_call.1} parent=35 // pred_fallthru
          _
      $region36: #{tpu_custom_call.1} parent=5 // pred_fallthru
        _
      %p1184 = scmp.le.s32.totalorder 2, %s13
      // Predicated region
      $region41: #{tpu_custom_call.1} parent=5 // pred_check
        %p1185 = pneg %p1184
      $region42: #{tpu_custom_call.1} parent=5 // pred_check_branch
        %1187 = sbr.rel (%p1185) target = $region44
      $region43: #{tpu_custom_call.1} parent=5 // pred_region
        %s1188 = ssub.s32 %s13, 2
        // Predicated region
        $region45: #{tpu_custom_call.1} parent=43 // pred_check
          %p1189 = pneg %p158
        $region46: #{tpu_custom_call.1} parent=43 // pred_check_branch
          %1191 = sbr.rel (%p1189) target = $region48
        $region47: #{tpu_custom_call.1} parent=43 // pred_region
          %s1192 = sand.u32 %s143, 1
          %s1193 = scalar_lea.sflag [#allocation4], %s1192
          %s1194 = sand.u32 %s143, 1
          %s1195 = smul.addr %s1194, 8
          %s1196 = scalar_lea.vmem [#allocation3], %s1195
          %1197 = dma.done %s1193, 128
        $region48: #{tpu_custom_call.1} parent=43 // pred_fallthru
          _
      $region44: #{tpu_custom_call.1} parent=5 // pred_fallthru
        _
    $region6: #{tpu_custom_call.1} parent=1 // loop_footer
      %s17 = sadd.s32 1, %s13
    $region7: #{tpu_custom_call.1} parent=1 // loop_footer_branch
      %12 = sbr.rel target = $region3
    $region8: #{tpu_custom_call.1} parent=1 // loop_exit
      _
    %1198 = vsyncpa [#allocation4], 1
    %s1199 = scalar_lea.sflag [#allocation4], 1
    %1200 = vsyncpa %s1199, 1

</llo_original>
